<compile_context>
chip_gen: v7x
topology: tpu7x:2x2x1
jax: 0.10.0
libtpu: 0.0.40
codegen_flags: <defaults>
</compile_context>

<pallas_src>
import functools

import jax
import jax.numpy as jnp
from jax import lax
from jax.experimental import pallas as pl
from jax.experimental.pallas import tpu as pltpu

NUM_LANES = 128
# Safe because every kv tile contains at least one valid key (Lk_pad - Lk < tk),
# so the running max m_new is always a normal number.
_MASK_VALUE = -1e30


def _round_up(x, m):
    return ((x + m - 1) // m) * m


def _rep_lanes(x, n):
    """Broadcast a lane-replicated (rows, NUM_LANES) value against width n.

    When n is a multiple of NUM_LANES this is a pure lane concat (no masked /
    sub-lane relayout); otherwise fall back to a (rows, 1) broadcast (only hit
    by tiny test tiles)."""
    w = x.shape[-1]
    if n == w:
        return x
    if n % w == 0:
        return jnp.concatenate([x] * (n // w), axis=-1)
    return x[:, :1]


def _flash_sdpa_kernel(q_ref, k_ref, v_ref, o_ref, q_sc, m_sc, l_sc, acc_sc, *,
                       scale, mm_dtype, lk, tk, dv, mask_keys):
    # Blocks: q_ref (1, tq, D), k_ref (1, tk, D), v_ref (1, tk, dv),
    #         o_ref (1, tq, dv).
    # Scratch: q_sc (tq, D) mm_dtype, m_sc/l_sc (tq, 128) f32, acc_sc (tq, dv) f32.
    kv = pl.program_id(2)
    last_kv = pl.num_programs(2) - 1

    @pl.when(kv == 0)
    def _init():
        q = q_ref[0]
        if scale:  # mirrors PyTorch truthiness: scale=None or 0.0 -> no scaling
            q = q * scale
        q_sc[...] = q.astype(q_sc.dtype)   # scale + cast hoisted out of the kv loop
        m_sc[...] = jnp.full(m_sc.shape, -jnp.inf, m_sc.dtype)
        l_sc[...] = jnp.zeros(l_sc.shape, l_sc.dtype)
        acc_sc[...] = jnp.zeros(acc_sc.shape, acc_sc.dtype)

    # QK^T as an NT matmul: contract the minor (D) dims -> no transpose on the
    # data path. bf16 operands, f32 accumulation.
    s = lax.dot_general(
        q_sc[...], k_ref[0].astype(mm_dtype),
        dimension_numbers=(((1,), (1,)), ((), ())),
        preferred_element_type=jnp.float32)                  # (tq, tk) f32

    v = v_ref[0].astype(mm_dtype)

    def _update(s):
        # Online-softmax update; all reductions / rescales stay in f32.
        # TODO(synk): on v6e/v7x a bf16 exp (cast s - m once) relieves the single
        # EUP; kept f32 here because v5e has no bf16 EUP/VPU path.
        m_prev = m_sc[...]                                               # (tq, 128)
        m_new = jnp.maximum(m_prev, jnp.max(s, axis=-1, keepdims=True))  # (tq, 128)
        alpha = jnp.exp(m_prev - m_new)                                  # (tq, 128)
        p = jnp.exp(s - _rep_lanes(m_new, s.shape[-1]))                  # (tq, tk) f32
        l_sc[...] = alpha * l_sc[...] + jnp.sum(p, axis=-1, keepdims=True)
        acc_sc[...] = _rep_lanes(alpha, dv) * acc_sc[...] + jnp.dot(
            p.astype(mm_dtype), v, preferred_element_type=jnp.float32)
        m_sc[...] = m_new

    if mask_keys:
        # Padded keys only ever live in the last kv tile; every other step runs
        # mask-free (saves iota + compare + select over (tq, tk) per step).
        @pl.when(kv != last_kv)
        def _no_mask():
            _update(s)

        @pl.when(kv == last_kv)
        def _masked():
            key_idx = kv * tk + lax.broadcasted_iota(jnp.int32, s.shape, 1)
            _update(jnp.where(key_idx < lk, s, _MASK_VALUE))
    else:
        _update(s)

    @pl.when(kv == last_kv)
    def _finalize():
        # Exact reciprocal: runs once per (b, q-tile); the approximate EUP vrcp's
        # ~1e-3 relative error is visible against an f32 reference.
        inv_l = 1.0 / l_sc[...]
        o_ref[0] = (acc_sc[...] * _rep_lanes(inv_l, dv)).astype(o_ref.dtype)


def scaled_dot_product_attention(Q, K, V, scale=None, *, tq=None, tk=None,
                                 matmul_dtype=jnp.bfloat16):
    """Pallas TPU implementation of Scaled_Dot_Product_Attention.forward.

    Q: (B, Lq, D), K: (B, Lk, D), V: (B, Lk, Dv) -> (B, Lq, Dv).
    matmul_dtype: operand dtype of the two MXU matmuls (accumulation is always
      f32). Default bf16. Pass None to keep the input dtype (f32-accurate path).
    """
    B, Lq, D = Q.shape
    Bk, Lk, Dk = K.shape
    Bv, Lkv, Dv = V.shape
    assert (Bk, Dk) == (B, D) and (Bv, Lkv) == (B, Lk), "shape mismatch"
    assert Lk >= 1

    mm_dtype = jnp.dtype(Q.dtype) if matmul_dtype is None else jnp.dtype(matmul_dtype)
    dt_size = jnp.dtype(Q.dtype).itemsize

    # Tile sizes: 512 keeps the kernel compute-bound with bf16 matmuls on
    # v6e/v7x (K/V re-streamed once per q tile) while the VMEM footprint stays
    # well under the 32 MiB default scoped limit everywhere. Sublane (second-
    # to-last block) dims must be multiples of 8.
    if tq is None:
        tq = min(512, _round_up(Lq, 8))
    if tk is None:
        tk = min(512, _round_up(Lk, 8))
    tq = _round_up(tq, 8)
    tk = _round_up(tk, 8)

    Lq_pad = _round_up(Lq, tq)
    Lk_pad = _round_up(Lk, tk)
    Dv_pad = _round_up(Dv, NUM_LANES)   # lane-dense output -> full-width stores
    mask_keys = Lk_pad != Lk

    if Lq_pad != Lq:
        Q = jnp.pad(Q, ((0, 0), (0, Lq_pad - Lq), (0, 0)))
    if Lk_pad != Lk:
        K = jnp.pad(K, ((0, 0), (0, Lk_pad - Lk), (0, 0)))
    if Lk_pad != Lk or Dv_pad != Dv:
        V = jnp.pad(V, ((0, 0), (0, Lk_pad - Lk), (0, Dv_pad - Dv)))

    q_tiles = Lq_pad // tq
    grid = (B, q_tiles, Lk_pad // tk)

    kernel = functools.partial(
        _flash_sdpa_kernel, scale=scale, mm_dtype=mm_dtype, lk=Lk, tk=tk,
        dv=Dv_pad, mask_keys=mask_keys)

    # K/V are streamed from HBM once per q tile; Q and the output once.
    cost = pl.CostEstimate(
        flops=2 * B * Lq_pad * Lk_pad * (D + Dv_pad),
        transcendentals=B * Lq_pad * Lk_pad,
        bytes_accessed=dt_size * (B * Lq_pad * D
                                  + q_tiles * B * Lk_pad * D
                                  + q_tiles * B * Lk_pad * Dv_pad
                                  + B * Lq_pad * Dv_pad),
    )

    out = pl.pallas_call(
        kernel,
        out_shape=jax.ShapeDtypeStruct((B, Lq_pad, Dv_pad), Q.dtype),
        grid_spec=pltpu.PrefetchScalarGridSpec(
            num_scalar_prefetch=0,
            grid=grid,
            in_specs=[
                pl.BlockSpec((1, tq, D), lambda b, qi, kv: (b, qi, 0)),
                # TODO(synk): on v5e, pipeline_mode=pl.Buffered(3) on K/V can hide
                # the fetch latency across the kv-tile pipeline restart.
                pl.BlockSpec((1, tk, D), lambda b, qi, kv: (b, kv, 0)),
                pl.BlockSpec((1, tk, Dv_pad), lambda b, qi, kv: (b, kv, 0)),
            ],
            # Same output block across the kv (reduction) axis -> resident
            # accumulator, written back once per (b, qi) tile.
            out_specs=pl.BlockSpec((1, tq, Dv_pad), lambda b, qi, kv: (b, qi, 0)),
            scratch_shapes=[
                pltpu.VMEM((tq, D), mm_dtype),             # scaled / cast Q
                pltpu.VMEM((tq, NUM_LANES), jnp.float32),  # running max m (lane-replicated)
                pltpu.VMEM((tq, NUM_LANES), jnp.float32),  # running denom l
                pltpu.VMEM((tq, Dv_pad), jnp.float32),     # output accumulator
            ],
        ),
        compiler_params=pltpu.CompilerParams(
            # b / q-tile axes shard across v7x's two TensorCores (ensure
            # B * q_tiles >= 2 for real shapes); kv is the sequential reduction
            # axis and stays last.
            dimension_semantics=("parallel", "parallel", "arbitrary"),
        ),
        cost_estimate=cost,
    )(Q, K, V)

    if Lq_pad != Lq or Dv_pad != Dv:
        out = out[:, :Lq, :Dv]
    return out


def _reference(Q, K, V, scale=None, mm_dtype=None):
    """Pure-JAX reference. mm_dtype=None -> exact f32 (Precision.HIGHEST);
    otherwise mirrors the kernel's matmul operand dtype."""
    q = Q * scale if scale else Q
    k, v = K, V
    if mm_dtype is not None:
        q, k = q.astype(mm_dtype), k.astype(mm_dtype)
    s = jnp.einsum("bqd,bkd->bqk", q, k, preferred_element_type=jnp.float32,
                   precision=lax.Precision.HIGHEST)
    p = jax.nn.softmax(s, axis=-1)
    if mm_dtype is not None:
        p, v = p.astype(mm_dtype), v.astype(mm_dtype)
    return jnp.einsum("bqk,bkd->bqd", p, v, preferred_element_type=jnp.float32,
                      precision=lax.Precision.HIGHEST).astype(Q.dtype)


if __name__ == "__main__":
    def check(got, want, atol, rtol, msg):
        assert got.shape == want.shape, msg + " (shape)"
        assert jnp.allclose(got, want, atol=atol, rtol=rtol), msg

    key = jax.random.PRNGKey(0)
    kq, kk, kv_ = jax.random.split(key, 3)

    # Small shapes consistent with the module's forward: [B, L, D].
    B, L, D = 2, 8, 32
    Q = jax.random.normal(kq, (B, L, D), dtype=jnp.float32)
    K = jax.random.normal(kk, (B, L, D), dtype=jnp.float32)
    V = jax.random.normal(kv_, (B, L, D), dtype=jnp.float32)
    scale = 1.0 / (D ** 0.5)

    # 1) Default bf16-MXU path vs the exact f32 reference (bf16-level tolerance).
    out = jax.block_until_ready(scaled_dot_product_attention(Q, K, V, scale=scale))
    check(out, _reference(Q, K, V, scale=scale), 5e-2, 5e-2, "bf16 path vs f32 ref")

    # 2) f32-MXU path vs the exact f32 reference (tight tolerance).
    out = jax.block_until_ready(
        scaled_dot_product_attention(Q, K, V, scale=scale, matmul_dtype=None))
    check(out, _reference(Q, K, V, scale=scale), 2e-3, 2e-3, "f32 path vs f32 ref")

    # 3) scale=None branch (PyTorch `if scale:` false), f32 path, tight tolerance.
    out = jax.block_until_ready(
        scaled_dot_product_attention(Q, K, V, matmul_dtype=None))
    check(out, _reference(Q, K, V), 2e-3, 2e-3, "no-scale f32 path vs f32 ref")

    # 4) scale=None branch, default bf16 path vs a precision-matched reference.
    out = jax.block_until_ready(scaled_dot_product_attention(Q, K, V))
    check(out, _reference(Q, K, V, mm_dtype=jnp.bfloat16), 2e-2, 2e-2,
          "no-scale bf16 path vs matched ref")

    # 5) Tiled / ragged path: non-multiple Lq, Lk and Dv != D with small tiles
    #    (exercises last-kv-tile key masking and the Dv lane padding).
    k1, k2, k3 = jax.random.split(jax.random.PRNGKey(1), 3)
    B2, Lq2, Lk2, D2, Dv2 = 2, 40, 72, 32, 48
    Q2 = jax.random.normal(k1, (B2, Lq2, D2), dtype=jnp.float32)
    K2 = jax.random.normal(k2, (B2, Lk2, D2), dtype=jnp.float32)
    V2 = jax.random.normal(k3, (B2, Lk2, Dv2), dtype=jnp.float32)
    sc2 = 1.0 / (D2 ** 0.5)
    out = jax.block_until_ready(
        scaled_dot_product_attention(Q2, K2, V2, scale=sc2, tq=16, tk=16))
    check(out, _reference(Q2, K2, V2, scale=sc2), 5e-2, 5e-2,
          "tiled bf16 path vs f32 ref")
    out = jax.block_until_ready(
        scaled_dot_product_attention(Q2, K2, V2, scale=sc2, tq=16, tk=16,
                                     matmul_dtype=None))
    check(out, _reference(Q2, K2, V2, scale=sc2), 2e-3, 2e-3,
          "tiled f32 path vs f32 ref")

    print("KERNEL_OK")
</pallas_src>

<mosaic_0001>
module attributes {stable_mosaic.version = 11 : i64} {
  func.func @_flash_sdpa_kernel(%arg0: i32, %arg1: i32, %arg2: i32, %arg3: memref<1x8x32xf32, #tpu.memory_space<vmem>>, %arg4: memref<1x8x32xf32, #tpu.memory_space<vmem>>, %arg5: memref<1x8x128xf32, #tpu.memory_space<vmem>>, %arg6: memref<1x8x128xf32, #tpu.memory_space<vmem>>, %arg7: memref<8x32xbf16, #tpu.memory_space<vmem>>, %arg8: memref<8x128xf32, #tpu.memory_space<vmem>>, %arg9: memref<8x128xf32, #tpu.memory_space<vmem>>, %arg10: memref<8x128xf32, #tpu.memory_space<vmem>>) attributes {dimension_semantics = [#tpu.dimension_semantics<parallel>, #tpu.dimension_semantics<parallel>, #tpu.dimension_semantics<arbitrary>], iteration_bounds = array<i64: 2, 1, 1>, scalar_prefetch = 0 : i64, scratch_operands = 4 : i64, tpu.core_type = #tpu.core_type<tc>, window_params = [{transform_indices = @transform_0, window_bounds = array<i64: 1, 8, 32>}, {transform_indices = @transform_1, window_bounds = array<i64: 1, 8, 32>}, {transform_indices = @transform_2, window_bounds = array<i64: 1, 8, 128>}, {transform_indices = @transform_3, window_bounds = array<i64: 1, 8, 128>}]} {
    %c0_i32 = arith.constant 0 : i32
    %0 = arith.cmpi eq, %arg2, %c0_i32 : i32
    %1 = arith.extui %0 : i1 to i32
    %c0_i32_0 = arith.constant 0 : i32
    %2 = arith.cmpi ne, %1, %c0_i32_0 : i32
    scf.if %2 {
      %c0_25 = arith.constant 0 : index
      %c0_26 = arith.constant 0 : index
      %c0_27 = arith.constant 0 : index
      %39 = vector.load %arg3[%c0_25, %c0_26, %c0_27] : memref<1x8x32xf32, #tpu.memory_space<vmem>>, vector<1x8x32xf32>
      %40 = vector.shape_cast %39 : vector<1x8x32xf32> to vector<8x32xf32>
      %cst_28 = arith.constant 0.176776692 : f32
      %41 = vector.broadcast %cst_28 : f32 to vector<8x32xf32>
      %42 = arith.mulf %40, %41 : vector<8x32xf32>
      %43 = arith.truncf %42 : vector<8x32xf32> to vector<8x32xbf16>
      %c0_29 = arith.constant 0 : index
      %c0_30 = arith.constant 0 : index
      %44 = vector.load %arg7[%c0_29, %c0_30] : memref<8x32xbf16, #tpu.memory_space<vmem>>, vector<8x32xbf16>
      tpu.vector_store %arg7[%c0_29, %c0_30], %43 {strides = array<i32>} : memref<8x32xbf16, #tpu.memory_space<vmem>>, vector<8x32xbf16>,
      %cst_31 = arith.constant 0xFF800000 : f32
      %45 = vector.broadcast %cst_31 : f32 to vector<8x128xf32>
      %c0_32 = arith.constant 0 : index
      %c0_33 = arith.constant 0 : index
      %46 = vector.load %arg8[%c0_32, %c0_33] : memref<8x128xf32, #tpu.memory_space<vmem>>, vector<8x128xf32>
      tpu.vector_store %arg8[%c0_32, %c0_33], %45 {strides = array<i32>} : memref<8x128xf32, #tpu.memory_space<vmem>>, vector<8x128xf32>,
      %cst_34 = arith.constant 0.000000e+00 : f32
      %47 = vector.broadcast %cst_34 : f32 to vector<8x128xf32>
      %c0_35 = arith.constant 0 : index
      %c0_36 = arith.constant 0 : index
      %48 = vector.load %arg9[%c0_35, %c0_36] : memref<8x128xf32, #tpu.memory_space<vmem>>, vector<8x128xf32>
      tpu.vector_store %arg9[%c0_35, %c0_36], %47 {strides = array<i32>} : memref<8x128xf32, #tpu.memory_space<vmem>>, vector<8x128xf32>,
      %cst_37 = arith.constant 0.000000e+00 : f32
      %49 = vector.broadcast %cst_37 : f32 to vector<8x128xf32>
      %c0_38 = arith.constant 0 : index
      %c0_39 = arith.constant 0 : index
      %50 = vector.load %arg10[%c0_38, %c0_39] : memref<8x128xf32, #tpu.memory_space<vmem>>, vector<8x128xf32>
      tpu.vector_store %arg10[%c0_38, %c0_39], %49 {strides = array<i32>} : memref<8x128xf32, #tpu.memory_space<vmem>>, vector<8x128xf32>,
    } else {
    }
    %c0 = arith.constant 0 : index
    %c0_1 = arith.constant 0 : index
    %3 = vector.load %arg7[%c0, %c0_1] : memref<8x32xbf16, #tpu.memory_space<vmem>>, vector<8x32xbf16>
    %c0_2 = arith.constant 0 : index
    %c0_3 = arith.constant 0 : index
    %c0_4 = arith.constant 0 : index
    %4 = vector.load %arg4[%c0_2, %c0_3, %c0_4] : memref<1x8x32xf32, #tpu.memory_space<vmem>>, vector<1x8x32xf32>
    %5 = vector.shape_cast %4 : vector<1x8x32xf32> to vector<8x32xf32>
    %6 = arith.truncf %5 : vector<8x32xf32> to vector<8x32xbf16>
    %cst = arith.constant dense<0.000000e+00> : vector<8x8xf32>
    %7 = tpu.matmul %3, %6, %cst {dimension_numbers = #tpu.dot_dimension_numbers<[1], [1], [0], [0], [0, 0, 1, 0], [], []>} : vector<8x32xbf16>, vector<8x32xbf16>, vector<8x8xf32> -> vector<8x8xf32>
    %c0_5 = arith.constant 0 : index
    %c0_6 = arith.constant 0 : index
    %c0_7 = arith.constant 0 : index
    %8 = vector.load %arg5[%c0_5, %c0_6, %c0_7] : memref<1x8x128xf32, #tpu.memory_space<vmem>>, vector<1x8x128xf32>
    %9 = vector.shape_cast %8 : vector<1x8x128xf32> to vector<8x128xf32>
    %10 = arith.truncf %9 : vector<8x128xf32> to vector<8x128xbf16>
    %c0_8 = arith.constant 0 : index
    %c0_9 = arith.constant 0 : index
    %11 = vector.load %arg8[%c0_8, %c0_9] : memref<8x128xf32, #tpu.memory_space<vmem>>, vector<8x128xf32>
    %cst_10 = arith.constant dense<0xFF800000> : vector<8xf32>
    %12 = vector.multi_reduction <maximumf>, %7, %cst_10 [1] : vector<8x8xf32> to vector<8xf32>
    %13 = vector.shape_cast %12 : vector<8xf32> to vector<8x1xf32>
    %14 = vector.broadcast %13 : vector<8x1xf32> to vector<8x128xf32>
    %15 = arith.maximumf %11, %14 : vector<8x128xf32>
    %16 = arith.subf %11, %15 : vector<8x128xf32>
    %17 = math.exp %16 : vector<8x128xf32>
    %18 = vector.extract_strided_slice %15 {offsets = [0, 0], sizes = [8, 1], strides = [1, 1]} : vector<8x128xf32> to vector<8x1xf32>
    %19 = vector.broadcast %18 : vector<8x1xf32> to vector<8x8xf32>
    %20 = arith.subf %7, %19 : vector<8x8xf32>
    %21 = math.exp %20 : vector<8x8xf32>
    %c0_11 = arith.constant 0 : index
    %c0_12 = arith.constant 0 : index
    %22 = vector.load %arg9[%c0_11, %c0_12] : memref<8x128xf32, #tpu.memory_space<vmem>>, vector<8x128xf32>
    %23 = arith.mulf %17, %22 : vector<8x128xf32>
    %cst_13 = arith.constant dense<0.000000e+00> : vector<8xf32>
    %24 = vector.multi_reduction <add>, %21, %cst_13 [1] : vector<8x8xf32> to vector<8xf32>
    %25 = vector.shape_cast %24 : vector<8xf32> to vector<8x1xf32>
    %26 = vector.broadcast %25 : vector<8x1xf32> to vector<8x128xf32>
    %27 = arith.addf %23, %26 : vector<8x128xf32>
    %c0_14 = arith.constant 0 : index
    %c0_15 = arith.constant 0 : index
    %28 = vector.load %arg9[%c0_14, %c0_15] : memref<8x128xf32, #tpu.memory_space<vmem>>, vector<8x128xf32>
    tpu.vector_store %arg9[%c0_14, %c0_15], %27 {strides = array<i32>} : memref<8x128xf32, #tpu.memory_space<vmem>>, vector<8x128xf32>,
    %c0_16 = arith.constant 0 : index
    %c0_17 = arith.constant 0 : index
    %29 = vector.load %arg10[%c0_16, %c0_17] : memref<8x128xf32, #tpu.memory_space<vmem>>, vector<8x128xf32>
    %30 = arith.mulf %17, %29 : vector<8x128xf32>
    %31 = arith.truncf %21 : vector<8x8xf32> to vector<8x8xbf16>
    %cst_18 = arith.constant dense<0.000000e+00> : vector<8x128xf32>
    %32 = tpu.matmul %31, %10, %cst_18 {dimension_numbers = #tpu.dot_dimension_numbers<[1], [0], [0], [1], [0, 0, 1, 1], [], []>} : vector<8x8xbf16>, vector<8x128xbf16>, vector<8x128xf32> -> vector<8x128xf32>
    %33 = arith.addf %30, %32 : vector<8x128xf32>
    %c0_19 = arith.constant 0 : index
    %c0_20 = arith.constant 0 : index
    %34 = vector.load %arg10[%c0_19, %c0_20] : memref<8x128xf32, #tpu.memory_space<vmem>>, vector<8x128xf32>
    tpu.vector_store %arg10[%c0_19, %c0_20], %33 {strides = array<i32>} : memref<8x128xf32, #tpu.memory_space<vmem>>, vector<8x128xf32>,
    %c0_21 = arith.constant 0 : index
    %c0_22 = arith.constant 0 : index
    %35 = vector.load %arg8[%c0_21, %c0_22] : memref<8x128xf32, #tpu.memory_space<vmem>>, vector<8x128xf32>
    tpu.vector_store %arg8[%c0_21, %c0_22], %15 {strides = array<i32>} : memref<8x128xf32, #tpu.memory_space<vmem>>, vector<8x128xf32>,
    %c0_i32_23 = arith.constant 0 : i32
    %36 = arith.cmpi eq, %arg2, %c0_i32_23 : i32
    %37 = arith.extui %36 : i1 to i32
    %c0_i32_24 = arith.constant 0 : i32
    %38 = arith.cmpi ne, %37, %c0_i32_24 : i32
    scf.if %38 {
      %c0_25 = arith.constant 0 : index
      %c0_26 = arith.constant 0 : index
      %39 = vector.load %arg9[%c0_25, %c0_26] : memref<8x128xf32, #tpu.memory_space<vmem>>, vector<8x128xf32>
      %cst_27 = arith.constant 1.000000e+00 : f32
      %40 = vector.broadcast %cst_27 : f32 to vector<8x128xf32>
      %41 = arith.divf %40, %39 : vector<8x128xf32>
      %c0_28 = arith.constant 0 : index
      %c0_29 = arith.constant 0 : index
      %42 = vector.load %arg10[%c0_28, %c0_29] : memref<8x128xf32, #tpu.memory_space<vmem>>, vector<8x128xf32>
      %43 = arith.mulf %42, %41 : vector<8x128xf32>
      %c0_30 = arith.constant 0 : index
      %c0_31 = arith.constant 0 : index
      %c0_32 = arith.constant 0 : index
      %44 = vector.load %arg6[%c0_30, %c0_31, %c0_32] : memref<1x8x128xf32, #tpu.memory_space<vmem>>, vector<1x8x128xf32>
      %45 = vector.shape_cast %44 : vector<1x8x128xf32> to vector<8x128xf32>
      %46 = vector.shape_cast %43 : vector<8x128xf32> to vector<1x8x128xf32>
      tpu.vector_store %arg6[%c0_30, %c0_31, %c0_32], %46 {strides = array<i32>} : memref<1x8x128xf32, #tpu.memory_space<vmem>>, vector<1x8x128xf32>,
    } else {
    }
    return
  }
  func.func @transform_0(%arg0: i32, %arg1: i32, %arg2: i32) -> (i32, i32, i32) {
    %c0_i32 = arith.constant 0 : i32
    %c0_i32_0 = arith.constant 0 : i32
    return %arg0, %arg1, %c0_i32 : i32, i32, i32
  }
  func.func @transform_1(%arg0: i32, %arg1: i32, %arg2: i32) -> (i32, i32, i32) {
    %c0_i32 = arith.constant 0 : i32
    %c0_i32_0 = arith.constant 0 : i32
    return %arg0, %arg2, %c0_i32 : i32, i32, i32
  }
  func.func @transform_2(%arg0: i32, %arg1: i32, %arg2: i32) -> (i32, i32, i32) {
    %c0_i32 = arith.constant 0 : i32
    %c0_i32_0 = arith.constant 0 : i32
    return %arg0, %arg2, %c0_i32 : i32, i32, i32
  }
  func.func @transform_3(%arg0: i32, %arg1: i32, %arg2: i32) -> (i32, i32, i32) {
    %c0_i32 = arith.constant 0 : i32
    %c0_i32_0 = arith.constant 0 : i32
    return %arg0, %arg1, %c0_i32 : i32, i32, i32
  }
}

</mosaic_0001>

<llo_original>
// kernel: tpu_custom_call.1
$region0: #{tpu_custom_call.1}
  #allocation0 [shape = 'u32[]', space=smem, size = 0x4, offset = 0x4, fixed_abs, tag = 'smem constant byte address 0x4 - core index']
  #allocation1 [shape = 'u32[144,128]{1,0:T(1,128)}', space=vmem, size = 0x12000, scoped, tag = 'internal scratch']
  #allocation2 [shape = 'bf16[8,32]{1,0:T(8,128)(2,1)}', space=vmem, size = 0x800, scoped, tag = 'scratch operand']
  #allocation3 [shape = 'f32[8,128]{1,0:T(8,128)}', space=vmem, size = 0x1000, scoped, tag = 'scratch operand']
  #allocation4 [shape = 'f32[8,128]{1,0:T(8,128)}', space=vmem, size = 0x1000, scoped, tag = 'scratch operand']
  #allocation5 [shape = 'f32[8,128]{1,0:T(8,128)}', space=vmem, size = 0x1000, scoped, tag = 'scratch operand']
  %s0 = inlined_call_operand.hbm [shape: f32[2,8,32], index: 0, kind: input, shape index: {}]
  %s1 = inlined_call_operand.hbm [shape: f32[2,8,32], index: 1, kind: input, shape index: {}]
  %s2 = inlined_call_operand.hbm [shape: f32[2,8,128], index: 2, kind: input, shape index: {}]
  %s3 = inlined_call_operand.hbm [shape: f32[2,8,128], index: 3, kind: output, shape index: {}]
  %s4 = sld [smem:[#allocation0]]
  $region65: #{tpu_custom_call.1} parent=0
    _
  %s6 = ssub.s32 1, %s4
  %s7 = scalar_select 0, %s6, %s4
  $region1: #{tpu_custom_call.1} parent=0
    #allocation6 [shape = 'u8[8192]{0}', space=vmem, size = 0x2000, scoped, tag = 'input window, operand 0']
    #allocation7 [shape = 's32[2]{0}', space=sflag, size = 0x8, scoped, tag = 'scoped memory for tpu_custom_call.1']
    #allocation8 [shape = 's32[2]{0}', space=sflag, size = 0x8, scoped, tag = 'scoped memory for tpu_custom_call.1']
    #allocation9 [shape = 'u8[8192]{0}', space=vmem, size = 0x2000, scoped, tag = 'input window, operand 1']
    #allocation10 [shape = 's32[2]{0}', space=sflag, size = 0x8, scoped, tag = 'scoped memory for tpu_custom_call.1']
    #allocation11 [shape = 'u8[8192]{0}', space=vmem, size = 0x2000, scoped, tag = 'input window, operand 2']
    #allocation12 [shape = 'u8[8192]{0}', space=vmem, size = 0x2000, scoped, tag = 'output window, operand 0']
    %8 = vsyncpa [#allocation7], 0
    %s9 = scalar_lea.sflag [#allocation7], 1
    %10 = vsyncpa %s9, 0
    %11 = vsyncpa [#allocation10], 0
    %s12 = scalar_lea.sflag [#allocation10], 1
    %13 = vsyncpa %s12, 0
    %14 = vsyncpa [#allocation8], 0
    %s15 = scalar_lea.sflag [#allocation8], 1
    %16 = vsyncpa %s15, 0
    loop: start=0, step=1, limit=4
    $region2: #{tpu_custom_call.1} parent=1 // loop_pre_header
      _
    $region3: #{tpu_custom_call.1} parent=1 // loop_header
      %s18 = sphi 0, %s22
      %p19 = scmp.ge.s32.totalorder %s18, 4
      %s25 = sphi 0, %s44
      %s26 = sphi 0, %s40
      %s27 = sphi 0, %s36
      %s28 = sphi 0, %s25
      %s29 = sphi 0, %s26
      %s30 = sphi 0, %s27
      %s31 = sphi 0, %s28
      %s32 = sphi 0, %s29
      %s33 = sphi 0, %s30
      %s49 = sphi 0, %s51
      %s52 = sphi 0, %s49
      %s53 = sphi 0, %s52
      %s69 = sphi 0, %s53
      %s77 = sphi 0, %s79
      %s80 = sphi 0, %s77
      %s81 = sphi 0, %s80
      %s97 = sphi 0, %s81
      %s105 = sphi 0, %s107
      %s108 = sphi 0, %s105
      %s109 = sphi 0, %s108
      %s125 = sphi 0, %s109
      %s133 = sphi 0, %s135
      %s136 = sphi 0, %s133
      %s137 = sphi 0, %s136
      %s153 = sphi 0, %s137
    $region4: #{tpu_custom_call.1} parent=1 // loop_header_branch
      %21 = sbr.rel (%p19) target = $region8
    $region5: #{tpu_custom_call.1} parent=1 // loop_body
      %s23 = ssub.s32 %s18, 1
      %s24 = ssub.s32 %s18, 2
      %s34 = sadd.s32 1, %s27
      %p35 = scmp.ge.s32.totalorder %s34, 1
      %s36 = scalar_select %p35, 0, %s34
      %s37 = sadd.s32 1, %s26
      %s38 = scalar_select %p35, %s37, %s26
      %p39 = scmp.ge.s32.totalorder %s38, 1
      %s40 = scalar_select %p39, 0, %s38
      %s41 = sadd.s32 1, %s25
      %s42 = scalar_select %p39, %s41, %s25
      %p43 = scmp.ge.s32.totalorder %s42, 2
      %s44 = scalar_select %p43, 0, %s42
      %s45 = ssub.s32 %s25, %s44
      %s46 = ssub.s32 %s26, %s40
      %s47 = sor.u32 %s45, %s46
      %p48 = scmp.eq.s32.totalorder %s47, 0
      %s50 = sadd.s32 %s49, 1
      %s51 = scalar_select %p48, %s49, %s50
      %p54 = pneg %p48
      %p55 = scmp.eq.s32.totalorder %s18, 1
      %p56 = por %p54, %p55
      %p57 = scmp.ne.s32.totalorder %s49, %s52
      %p58 = scmp.eq.s32.totalorder %s18, 0
      %p59 = por %p57, %p58
      %p60 = scmp.ne.s32.totalorder %s49, %s52
      %p61 = scmp.eq.s32.totalorder %s23, 1
      %p62 = por %p60, %p61
      %p63 = scmp.ne.s32.totalorder %s52, %s53
      %p64 = scmp.eq.s32.totalorder %s23, 0
      %p65 = por %p63, %p64
      %p66 = scmp.ne.s32.totalorder %s52, %s53
      %p67 = scmp.eq.s32.totalorder %s24, 1
      %p68 = por %p66, %p67
      %p70 = scmp.ne.s32.totalorder %s53, %s69
      %p71 = scmp.eq.s32.totalorder %s24, 0
      %p72 = por %p70, %p71
      %s73 = ssub.s32 %s25, %s44
      %s74 = ssub.s32 %s27, %s36
      %s75 = sor.u32 %s73, %s74
      %p76 = scmp.eq.s32.totalorder %s75, 0
      %s78 = sadd.s32 %s77, 1
      %s79 = scalar_select %p76, %s77, %s78
      %p82 = pneg %p76
      %p83 = scmp.eq.s32.totalorder %s18, 1
      %p84 = por %p82, %p83
      %p85 = scmp.ne.s32.totalorder %s77, %s80
      %p86 = scmp.eq.s32.totalorder %s18, 0
      %p87 = por %p85, %p86
      %p88 = scmp.ne.s32.totalorder %s77, %s80
      %p89 = scmp.eq.s32.totalorder %s23, 1
      %p90 = por %p88, %p89
      %p91 = scmp.ne.s32.totalorder %s80, %s81
      %p92 = scmp.eq.s32.totalorder %s23, 0
      %p93 = por %p91, %p92
      %p94 = scmp.ne.s32.totalorder %s80, %s81
      %p95 = scmp.eq.s32.totalorder %s24, 1
      %p96 = por %p94, %p95
      %p98 = scmp.ne.s32.totalorder %s81, %s97
      %p99 = scmp.eq.s32.totalorder %s24, 0
      %p100 = por %p98, %p99
      %s101 = ssub.s32 %s25, %s44
      %s102 = ssub.s32 %s27, %s36
      %s103 = sor.u32 %s101, %s102
      %p104 = scmp.eq.s32.totalorder %s103, 0
      %s106 = sadd.s32 %s105, 1
      %s107 = scalar_select %p104, %s105, %s106
      %p110 = pneg %p104
      %p111 = scmp.eq.s32.totalorder %s18, 1
      %p112 = por %p110, %p111
      %p113 = scmp.ne.s32.totalorder %s105, %s108
      %p114 = scmp.eq.s32.totalorder %s18, 0
      %p115 = por %p113, %p114
      %p116 = scmp.ne.s32.totalorder %s105, %s108
      %p117 = scmp.eq.s32.totalorder %s23, 1
      %p118 = por %p116, %p117
      %p119 = scmp.ne.s32.totalorder %s108, %s109
      %p120 = scmp.eq.s32.totalorder %s23, 0
      %p121 = por %p119, %p120
      %p122 = scmp.ne.s32.totalorder %s108, %s109
      %p123 = scmp.eq.s32.totalorder %s24, 1
      %p124 = por %p122, %p123
      %p126 = scmp.ne.s32.totalorder %s109, %s125
      %p127 = scmp.eq.s32.totalorder %s24, 0
      %p128 = por %p126, %p127
      %s129 = ssub.s32 %s25, %s44
      %s130 = ssub.s32 %s26, %s40
      %s131 = sor.u32 %s129, %s130
      %p132 = scmp.eq.s32.totalorder %s131, 0
      %s134 = sadd.s32 %s133, 1
      %s135 = scalar_select %p132, %s133, %s134
      %p138 = pneg %p132
      %p139 = scmp.eq.s32.totalorder %s18, 1
      %p140 = por %p138, %p139
      %p141 = scmp.ne.s32.totalorder %s133, %s136
      %p142 = scmp.eq.s32.totalorder %s18, 0
      %p143 = por %p141, %p142
      %p144 = scmp.ne.s32.totalorder %s133, %s136
      %p145 = scmp.eq.s32.totalorder %s23, 1
      %p146 = por %p144, %p145
      %p147 = scmp.ne.s32.totalorder %s136, %s137
      %p148 = scmp.eq.s32.totalorder %s23, 0
      %p149 = por %p147, %p148
      %p150 = scmp.ne.s32.totalorder %s136, %s137
      %p151 = scmp.eq.s32.totalorder %s24, 1
      %p152 = por %p150, %p151
      %p154 = scmp.ne.s32.totalorder %s137, %s153
      %p155 = scmp.eq.s32.totalorder %s24, 0
      %p156 = por %p154, %p155
      %p157 = scmp.le.s32.totalorder 1, %s18
      %p158 = scmp.lt.s32.totalorder %s18, 3
      %p159 = pnand %p157, %p158
      %p160 = pneg %p159
      // Predicated region
      $region9: #{tpu_custom_call.1} parent=5 // pred_check
        _
      $region10: #{tpu_custom_call.1} parent=5 // pred_check_branch
        %162 = sbr.rel (%p159) target = $region12
      $region11: #{tpu_custom_call.1} parent=5 // pred_region
        %s163 = ssub.s32 %s18, 1
      $region12: #{tpu_custom_call.1} parent=5 // pred_fallthru
        _
      %p164 = scmp.lt.s32.totalorder %s18, 2
      // Predicated region
      $region13: #{tpu_custom_call.1} parent=5 // pred_check
        %p165 = pneg %p164
      $region14: #{tpu_custom_call.1} parent=5 // pred_check_branch
        %167 = sbr.rel (%p165) target = $region16
      $region15: #{tpu_custom_call.1} parent=5 // pred_region
        // Predicated region
        $region17: #{tpu_custom_call.1} parent=15 // pred_check
          %p168 = pneg %p59
        $region18: #{tpu_custom_call.1} parent=15 // pred_check_branch
          %170 = sbr.rel (%p168) target = $region20
        $region19: #{tpu_custom_call.1} parent=15 // pred_region
          %s171 = sand.u32 %s49, 1
          %s172 = scalar_lea.sflag [#allocation7], %s171
          %s173 = sand.u32 %s49, 1
          %s174 = smul.addr %s173, 8
          %s175 = scalar_lea.vmem [#allocation6], %s174
          %s177 = ssub.s32 128, 128
          %178 = vsyncadd %s172, %s177
          %s179 = sadd.s32 %s26, %s25
          %s180 = smul.addr %s179, 128
          %s181 = scalar_lea.hbm %s0, %s180
          %s183 = sshll.u32 %s175, 4
          %s184 = int_to_ptr.vmem [resolvable:$true] %s183
          %186 = dma.hbm_to_vmem [thread:$0]  %s181, 128, %s184, %s172
        $region20: #{tpu_custom_call.1} parent=15 // pred_fallthru
          _
        // Predicated region
        $region21: #{tpu_custom_call.1} parent=15 // pred_check
          %p187 = pneg %p87
        $region22: #{tpu_custom_call.1} parent=15 // pred_check_branch
          %189 = sbr.rel (%p187) target = $region24
        $region23: #{tpu_custom_call.1} parent=15 // pred_region
          %s190 = sand.u32 %s18, 1
          %s191 = scalar_lea.sflag [#allocation10], %s190
          %s192 = sand.u32 %s77, 1
          %s193 = smul.addr %s192, 8
          %s194 = scalar_lea.vmem [#allocation9], %s193
          %s196 = ssub.s32 128, 128
          %197 = vsyncadd %s191, %s196
          %s198 = sadd.s32 %s27, %s25
          %s199 = smul.addr %s198, 128
          %s200 = scalar_lea.hbm %s1, %s199
          %s202 = sshll.u32 %s194, 4
          %s203 = int_to_ptr.vmem [resolvable:$true] %s202
          %205 = dma.hbm_to_vmem [thread:$0]  %s200, 128, %s203, %s191
        $region24: #{tpu_custom_call.1} parent=15 // pred_fallthru
          _
        // Predicated region
        $region25: #{tpu_custom_call.1} parent=15 // pred_check
          %p206 = pneg %p115
        $region26: #{tpu_custom_call.1} parent=15 // pred_check_branch
          %208 = sbr.rel (%p206) target = $region28
        $region27: #{tpu_custom_call.1} parent=15 // pred_region
          %s209 = sand.u32 %s18, 1
          %s210 = scalar_lea.sflag [#allocation10], %s209
          %s211 = sand.u32 %s105, 1
          %s212 = smul.addr %s211, 8
          %s213 = scalar_lea.vmem [#allocation11], %s212
          %s215 = ssub.s32 128, 128
          %216 = vsyncadd %s210, %s215
          %s217 = sadd.s32 %s27, %s25
          %s218 = smul.addr %s217, 128
          %s219 = scalar_lea.hbm %s2, %s218
          %s221 = sshll.u32 %s213, 4
          %s222 = int_to_ptr.vmem [resolvable:$true] %s221
          %224 = dma.hbm_to_vmem [thread:$0]  %s219, 128, %s222, %s210
        $region28: #{tpu_custom_call.1} parent=15 // pred_fallthru
          _
      $region16: #{tpu_custom_call.1} parent=5 // pred_fallthru
        _
      %p225 = scmp.le.s32.totalorder 1, %s18
      %p226 = scmp.lt.s32.totalorder %s18, 3
      %p227 = pnand %p225, %p226
      %p228 = pneg %p227
      // Predicated region
      $region29: #{tpu_custom_call.1} parent=5 // pred_check
        _
      $region30: #{tpu_custom_call.1} parent=5 // pred_check_branch
        %230 = sbr.rel (%p227) target = $region32
      $region31: #{tpu_custom_call.1} parent=5 // pred_region
        %s231 = ssub.s32 %s18, 1
        %s232 = sand.u32 %s52, 1
        %s233 = scalar_lea.sflag [#allocation7], %s232
        %s234 = sand.u32 %s52, 1
        %s235 = smul.addr %s234, 8
        %s236 = scalar_lea.vmem [#allocation6], %s235
        // Predicated region
        $region33: #{tpu_custom_call.1} parent=31 // pred_check
          %p237 = pneg %p65
        $region34: #{tpu_custom_call.1} parent=31 // pred_check_branch
          %239 = sbr.rel (%p237) target = $region36
        $region35: #{tpu_custom_call.1} parent=31 // pred_region
          %240 = dma.done %s233, 128
        $region36: #{tpu_custom_call.1} parent=31 // pred_fallthru
          _
        %s241 = sand.u32 %s23, 1
        %s242 = scalar_lea.sflag [#allocation10], %s241
        %s243 = sand.u32 %s80, 1
        %s244 = smul.addr %s243, 8
        %s245 = scalar_lea.vmem [#allocation9], %s244
        // Predicated region
        $region37: #{tpu_custom_call.1} parent=31 // pred_check
          %p246 = pneg %p93
        $region38: #{tpu_custom_call.1} parent=31 // pred_check_branch
          %248 = sbr.rel (%p246) target = $region40
        $region39: #{tpu_custom_call.1} parent=31 // pred_region
          %249 = dma.done %s242, 128
        $region40: #{tpu_custom_call.1} parent=31 // pred_fallthru
          _
        %s250 = sand.u32 %s23, 1
        %s251 = scalar_lea.sflag [#allocation10], %s250
        %s252 = sand.u32 %s108, 1
        %s253 = smul.addr %s252, 8
        %s254 = scalar_lea.vmem [#allocation11], %s253
        // Predicated region
        $region41: #{tpu_custom_call.1} parent=31 // pred_check
          %p255 = pneg %p121
        $region42: #{tpu_custom_call.1} parent=31 // pred_check_branch
          %257 = sbr.rel (%p255) target = $region44
        $region43: #{tpu_custom_call.1} parent=31 // pred_region
          %258 = dma.done %s251, 128
        $region44: #{tpu_custom_call.1} parent=31 // pred_fallthru
          _
        %s259 = sand.u32 %s52, 1
        %s260 = scalar_lea.sflag [#allocation7], %s259
        %s261 = sand.u32 %s52, 1
        %s262 = smul.addr %s261, 8
        %s263 = scalar_lea.vmem [#allocation6], %s262
        %p264 = pneg %p65
        %p265 = pneg %p62
        %s266 = sand.u32 %s23, 1
        %s267 = scalar_lea.sflag [#allocation10], %s266
        %s268 = sand.u32 %s80, 1
        %s269 = smul.addr %s268, 8
        %s270 = scalar_lea.vmem [#allocation9], %s269
        %p271 = pneg %p93
        %p272 = pneg %p90
        %s273 = sand.u32 %s23, 1
        %s274 = scalar_lea.sflag [#allocation10], %s273
        %s275 = sand.u32 %s108, 1
        %s276 = smul.addr %s275, 8
        %s277 = scalar_lea.vmem [#allocation11], %s276
        %p278 = pneg %p121
        %p279 = pneg %p118
        %p280 = pneg %p149
        %p281 = pneg %p146
        %s282 = sand.u32 %s136, 1
        %s283 = scalar_lea.sflag [#allocation8], %s282
        %s284 = sand.u32 %s136, 1
        %s285 = smul.addr %s284, 8
        %s286 = scalar_lea.vmem [#allocation12], %s285
        %p288 = scmp.eq.s32.totalorder %s30, 0
        // Predicated region
        $region45: #{tpu_custom_call.1} parent=31 // pred_check
          %p289 = pneg %p288
        $region46: #{tpu_custom_call.1} parent=31 // pred_check_branch
          %291 = sbr.rel (%p289) target = $region48
        $region47: #{tpu_custom_call.1} parent=31 // pred_region
          %v292 = vld [vmem:[%s236] sm:$0xff]
          %v293 = vmul.f32 %v292, 0.17677669
          %v294 = vpack.c.bf16 %v293, %v293
          %vm295 = vcmask 257024
          %296 = vst.msk [vmem:[#allocation2] sm:$0xf] %vm295, %v294
          %297 = vst [vmem:[#allocation3] sm:$0xff] -inf
          %298 = vst [vmem:[#allocation4] sm:$0xff] 0.0
          %299 = vst [vmem:[#allocation5] sm:$0xff] 0.0
        $region48: #{tpu_custom_call.1} parent=31 // pred_fallthru
          _
        %v300 = vld [vmem:[#allocation2] sm:$0xf]
        %v301 = vld [vmem:[%s245] sm:$0xff]
        %v302 = vpack.c.bf16 %v301, %v301
        %vm303 = vcmask 261120
        %v305 = vsel %vm303, %v300, 0
        %v308 = vsel %vm303, %v302, 0
        %310 = vmatprep.subr.bf16.mxu0 0
        %311 = vmatpush1.bf16.xpose.msra.mxu0 %v308
        %312 = vmatprep.subr.bf16.mxu0 0
        %313 = vmatpush1.bf16.xpose.msra.mxu0 0
        %314 = vmatprep.subr.bf16.mxu0 0
        %315 = vmatpush1.bf16.xpose.msra.mxu0 0
        %316 = vmatprep.subr.bf16.mxu0 0
        %317 = vmatpush1.bf16.xpose.msra.mxu0 0
        %318 = vmatprep.subr.bf16.mxu0 0
        %319 = vmatpush1.bf16.xpose.msra.mxu0 0
        %320 = vmatprep.subr.bf16.mxu0 0
        %321 = vmatpush1.bf16.xpose.msra.mxu0 0
        %322 = vmatprep.subr.bf16.mxu0 0
        %323 = vmatpush1.bf16.xpose.msra.mxu0 0
        %324 = vmatprep.subr.bf16.mxu0 0
        %325 = vmatpush1.bf16.xpose.msra.mxu0 0
        %326 = vmatprep.subr.bf16.mxu0 0
        %327 = vmatpush1.bf16.xpose.msra.mxu0 0
        %328 = vmatprep.subr.bf16.mxu0 0
        %329 = vmatpush1.bf16.xpose.msra.mxu0 0
        %330 = vmatprep.subr.bf16.mxu0 0
        %331 = vmatpush1.bf16.xpose.msra.mxu0 0
        %332 = vmatprep.subr.bf16.mxu0 0
        %333 = vmatpush1.bf16.xpose.msra.mxu0 0
        %334 = vmatprep.subr.bf16.mxu0 0
        %335 = vmatpush1.bf16.xpose.msra.mxu0 0
        %336 = vmatprep.subr.bf16.mxu0 0
        %337 = vmatpush1.bf16.xpose.msra.mxu0 0
        %338 = vmatprep.subr.bf16.mxu0 0
        %339 = vmatpush1.bf16.xpose.msra.mxu0 0
        %340 = vmatprep.subr.bf16.mxu0 0
        %341 = vmatpush1.bf16.xpose.msra.mxu0 0
        %342 = vmatprep.mubr.bf16.mxu0 0
        %343 = vmatmul.mubr.bf16.gmra.mrb[0].mxu0 %v305
        %v344 = vpop.f32.mrb[0].mxu0
        %v345 = vadd.f32 0.0, %v344
        %v346 = vpop.f32.mrb[0].mxu0
        %v347 = vpop.f32.mrb[0].mxu0
        %v348 = vpop.f32.mrb[0].mxu0
        %349 = vdwg.mxu0
        %v350 = vld [vmem:[%s254] sm:$0xff]
        %v351 = vpack.c.bf16 %v350, %v350
        %v352 = vld [vmem:[#allocation3] sm:$0xff]
        %vm353 = vcmask 64512
        %v354 = vsel %vm353, %v345, -inf
        %355 = vmax.xlane.f32.xlu0 %v354
        %v356 = vpop.xlane.xlu0 %355
        %v357 = vmax.f32 %v352, %v356
        %v358 = vsub.f32 %v352, %v357
        %v359 = vmul.f32 %v358, 1.442695
        %v360 = vpow.pop %v359
        %362 = vset.pattern.permute.xlu0 0
        %363 = vperm.xlu0 %362, %v357
        %v364 = vpop.permute.xlu0 %363
        %v366 = vsub.f32 %v345, %v364
        %v367 = vmul.f32 %v366, 1.442695
        %v368 = vpow.pop %v367
        %v369 = vld [vmem:[#allocation4] sm:$0xff]
        %v370 = vmul.f32 %v360, %v369
        %v371 = vsel %vm353, %v368, 0.0
        %372 = vadd.xlane.f32.xlu0 %v371
        %v373 = vpop.xlane.xlu0 %372
        %v374 = vadd.f32 %v370, %v373
        %375 = vst [vmem:[#allocation4] sm:$0xff] %v374
        %v376 = vld [vmem:[#allocation5] sm:$0xff]
        %v377 = vmul.f32 %v360, %v376
        %v378 = vpack.c.bf16 %v368, %v368
        %v380 = vsel %vm353, %v378, 0
        %vm382 = vcmask 1043456
        %v384 = vsel %vm382, %v351, 0
        %386 = vmatprep.subr.bf16.mxu0 0
        %387 = vmatpush1.bf16.msra.mxu0 %v384
        %388 = vmatprep.subr.bf16.mxu0 0
        %389 = vmatpush1.bf16.msra.mxu0 0
        %390 = vmatprep.subr.bf16.mxu0 0
        %391 = vmatpush1.bf16.msra.mxu0 0
        %392 = vmatprep.subr.bf16.mxu0 0
        %393 = vmatpush1.bf16.msra.mxu0 0
        %394 = vmatprep.subr.bf16.mxu0 0
        %395 = vmatpush1.bf16.msra.mxu0 0
        %396 = vmatprep.subr.bf16.mxu0 0
        %397 = vmatpush1.bf16.msra.mxu0 0
        %398 = vmatprep.subr.bf16.mxu0 0
        %399 = vmatpush1.bf16.msra.mxu0 0
        %400 = vmatprep.subr.bf16.mxu0 0
        %401 = vmatpush1.bf16.msra.mxu0 0
        %402 = vmatprep.subr.bf16.mxu0 0
        %403 = vmatpush1.bf16.msra.mxu0 0
        %404 = vmatprep.subr.bf16.mxu0 0
        %405 = vmatpush1.bf16.msra.mxu0 0
        %406 = vmatprep.subr.bf16.mxu0 0
        %407 = vmatpush1.bf16.msra.mxu0 0
        %408 = vmatprep.subr.bf16.mxu0 0
        %409 = vmatpush1.bf16.msra.mxu0 0
        %410 = vmatprep.subr.bf16.mxu0 0
        %411 = vmatpush1.bf16.msra.mxu0 0
        %412 = vmatprep.subr.bf16.mxu0 0
        %413 = vmatpush1.bf16.msra.mxu0 0
        %414 = vmatprep.subr.bf16.mxu0 0
        %415 = vmatpush1.bf16.msra.mxu0 0
        %416 = vmatprep.subr.bf16.mxu0 0
        %417 = vmatpush1.bf16.msra.mxu0 0
        %418 = vmatprep.mubr.bf16.mxu0 0
        %419 = vmatmul.mubr.bf16.gmra.mrb[0].mxu0 %v380
        %v420 = vpop.f32.mrb[0].mxu0
        %v421 = vadd.f32 0.0, %v420
        %v422 = vpop.f32.mrb[0].mxu0
        %v423 = vpop.f32.mrb[0].mxu0
        %v424 = vpop.f32.mrb[0].mxu0
        %425 = vdwg.mxu0
        %v426 = vadd.f32 %v377, %v421
        %427 = vst [vmem:[#allocation5] sm:$0xff] %v426
        %428 = vst [vmem:[#allocation3] sm:$0xff] %v357
        // Predicated region
        $region49: #{tpu_custom_call.1} parent=31 // pred_check
          %p429 = pneg %p288
        $region50: #{tpu_custom_call.1} parent=31 // pred_check_branch
          %431 = sbr.rel (%p429) target = $region52
        $region51: #{tpu_custom_call.1} parent=31 // pred_region
          %v432 = vld [vmem:[#allocation4] sm:$0xff]
          %v433 = vrcp.pop %v432
          %v434 = vmul.f32 1.0, %v433
          %v435 = vld [vmem:[#allocation5] sm:$0xff]
          %v436 = vmul.f32 %v435, %v434
          %437 = vst [vmem:[%s286] sm:$0xff] %v436
        $region52: #{tpu_custom_call.1} parent=31 // pred_fallthru
          _
        %s438 = sand.u32 %s136, 1
        %s439 = scalar_lea.sflag [#allocation8], %s438
        %s440 = sand.u32 %s136, 1
        %s441 = smul.addr %s440, 8
        %s442 = scalar_lea.vmem [#allocation12], %s441
        // Predicated region
        $region53: #{tpu_custom_call.1} parent=31 // pred_check
          %p443 = pneg %p146
        $region54: #{tpu_custom_call.1} parent=31 // pred_check_branch
          %445 = sbr.rel (%p443) target = $region56
        $region55: #{tpu_custom_call.1} parent=31 // pred_region
          %s447 = ssub.s32 128, 128
          %448 = vsyncadd %s439, %s447
          %s449 = sadd.s32 %s29, %s28
          %s450 = smul.addr %s449, 128
          %s451 = scalar_lea.hbm %s3, %s450
          %s453 = sshll.u32 %s442, 4
          %s454 = int_to_ptr.vmem [resolvable:$true] %s453
          %456 = dma.vmem_to_hbm [thread:$0]  %s454, 128, %s451, %s439
        $region56: #{tpu_custom_call.1} parent=31 // pred_fallthru
          _
      $region32: #{tpu_custom_call.1} parent=5 // pred_fallthru
        _
      %p457 = scmp.le.s32.totalorder 2, %s18
      // Predicated region
      $region57: #{tpu_custom_call.1} parent=5 // pred_check
        %p458 = pneg %p457
      $region58: #{tpu_custom_call.1} parent=5 // pred_check_branch
        %460 = sbr.rel (%p458) target = $region60
      $region59: #{tpu_custom_call.1} parent=5 // pred_region
        %s461 = ssub.s32 %s18, 2
        // Predicated region
        $region61: #{tpu_custom_call.1} parent=59 // pred_check
          %p462 = pneg %p152
        $region62: #{tpu_custom_call.1} parent=59 // pred_check_branch
          %464 = sbr.rel (%p462) target = $region64
        $region63: #{tpu_custom_call.1} parent=59 // pred_region
          %s465 = sand.u32 %s137, 1
          %s466 = scalar_lea.sflag [#allocation8], %s465
          %s467 = sand.u32 %s137, 1
          %s468 = smul.addr %s467, 8
          %s469 = scalar_lea.vmem [#allocation12], %s468
          %470 = dma.done %s466, 128
        $region64: #{tpu_custom_call.1} parent=59 // pred_fallthru
          _
      $region60: #{tpu_custom_call.1} parent=5 // pred_fallthru
        _
    $region6: #{tpu_custom_call.1} parent=1 // loop_footer
      %s22 = sadd.s32 1, %s18
    $region7: #{tpu_custom_call.1} parent=1 // loop_footer_branch
      %17 = sbr.rel target = $region3
    $region8: #{tpu_custom_call.1} parent=1 // loop_exit
      _
    %471 = vsyncpa [#allocation7], 1
    %s472 = scalar_lea.sflag [#allocation7], 1
    %473 = vsyncpa %s472, 1
    %474 = vsyncpa [#allocation10], 1
    %s475 = scalar_lea.sflag [#allocation10], 1
    %476 = vsyncpa %s475, 1
    %477 = vsyncpa [#allocation8], 1
    %s478 = scalar_lea.sflag [#allocation8], 1
    %479 = vsyncpa %s478, 1

</llo_original>
